<compile_context>
chip_gen: v6e
topology: v6e:2x2x1
jax: 0.10.0
libtpu: 0.0.40
codegen_flags: <defaults>
</compile_context>

<pallas_src>
import functools

import jax
import jax.numpy as jnp
from jax.experimental import pallas as pl
from jax.experimental.pallas import tpu as pltpu


# ------------------------------ helpers ------------------------------------ #

_ACT_CODES = {None: 0, "identity": 0, "relu": 1, "tanh": 2, "sigmoid": 3}


def _round_up(x, m):
    return (x + m - 1) // m * m


# ----------------------------- Pallas kernel ------------------------------- #

def _mlp_fused_kernel(codes_ref,        # SMEM (L,) int32  (scalar prefetch)
                      x_ref,            # VMEM (tm, D)     input batch tile (f32)
                      w_ref,            # VMEM (1, D, D)   this layer's weight (compute dtype)
                      b_ref,            # VMEM (1, 1, D)   this layer's bias (f32)
                      o_ref,            # VMEM (tm, D)     output batch tile
                      act_ref):         # VMEM scratch (tm, D) f32 — resident activation
    li = pl.program_id(1)

    # Layer 0: load the input tile into the resident activation buffer.
    @pl.when(li == 0)
    def _():
        act_ref[...] = x_ref[...].astype(jnp.float32)

    cur = act_ref[...]                       # (tm, D) f32
    w = w_ref[0]                             # (D, D) compute dtype (f32 or bf16)
    y = jnp.dot(cur.astype(w.dtype), w, preferred_element_type=jnp.float32)
    y = y + b_ref[0]                         # (1, D) f32 bias, broadcast over batch

    # Per-layer activation selected by an SMEM code (0=id, 1=relu, 2=tanh, 3=sigmoid).
    code = codes_ref[li]
    y = jnp.where(code == 1, jnp.maximum(y, 0.0), y)
    y = jnp.where(code == 2, jnp.tanh(y), y)
    y = jnp.where(code == 3, jax.nn.sigmoid(y), y)

    act_ref[...] = y                         # carry to the next layer (stays in VMEM)

    @pl.when(li == pl.num_programs(1) - 1)
    def _():
        o_ref[...] = y.astype(o_ref.dtype)


# ------------------------------ wrapper ------------------------------------ #

def mlp_forward(x, params, act_names, compute_dtype=jnp.float32):
    """Fused MLP forward: x -> act[i](x @ W_t[i] + b[i]) for all layers, one kernel.

    params: list of (w_t, b) with w_t shape (d_in, d_out) (torch weight transposed),
            b shape (d_out,), all float32.
    act_names: list of activation names per layer (or None/[] for identity).
    compute_dtype: dtype fed to the MXU (f32 or bf16); accumulation is always f32.
    """
    B, d_in0 = x.shape
    L = len(params)
    assert L >= 1
    dims = [d_in0] + [w_t.shape[1] for (w_t, _) in params]

    # Lane-dense padded feature width and sublane-aligned batch tile.
    D = _round_up(max(dims), 128)
    tm = min(_round_up(B, 8), 128)
    B_pad = _round_up(B, tm)
    nb = B_pad // tm

    # Pad + pack inputs / stacked parameters (one-time layout plumbing).
    x_pad = jnp.pad(x.astype(jnp.float32), ((0, B_pad - B), (0, D - d_in0)))
    w_blocks, b_blocks = [], []
    for (w_t, b) in params:
        di, do = w_t.shape
        w_pad = jnp.zeros((D, D), compute_dtype).at[:di, :do].set(
            w_t.astype(compute_dtype))
        b_pad = jnp.zeros((D,), jnp.float32).at[:do].set(b.astype(jnp.float32))
        w_blocks.append(w_pad)
        b_blocks.append(b_pad)
    w_stack = jnp.stack(w_blocks)                  # (L, D, D)
    b_stack = jnp.stack(b_blocks)[:, None, :]      # (L, 1, D)

    if act_names:
        assert len(act_names) >= L
        codes = [_ACT_CODES[act_names[i]] for i in range(L)]
    else:
        codes = [0] * L
    act_codes = jnp.asarray(codes, dtype=jnp.int32)
    n_transcendental_layers = sum(1 for c in codes if c in (2, 3))

    # VMEM budget (double-buffered blocks + scratch) and advisory cost estimate.
    w_item = jnp.dtype(compute_dtype).itemsize
    vmem_need = (2 * tm * D * 4        # x blocks
                 + 2 * D * D * w_item  # weight blocks (streamed per layer)
                 + 2 * D * 4           # bias blocks
                 + 2 * tm * D * 4      # output blocks
                 + tm * D * 4)         # resident activation scratch
    vmem_limit = int(min(64 * 1024 * 1024,
                         max(2 * vmem_need, 32 * 1024 * 1024)))

    cost = pl.CostEstimate(
        flops=2 * B_pad * D * D * L,
        transcendentals=n_transcendental_layers * B_pad * D,
        bytes_accessed=(x_pad.size * 4 + w_stack.size * w_item
                        + b_stack.size * 4 + B_pad * D * 4),
    )

    grid_spec = pltpu.PrefetchScalarGridSpec(
        num_scalar_prefetch=1,
        grid=(nb, L),                                   # layer axis innermost
        in_specs=[
            pl.BlockSpec((tm, D), lambda bi, li, codes: (bi, 0)),
            pl.BlockSpec((1, D, D), lambda bi, li, codes: (li, 0, 0)),
            pl.BlockSpec((1, 1, D), lambda bi, li, codes: (li, 0, 0)),
        ],
        out_specs=pl.BlockSpec((tm, D), lambda bi, li, codes: (bi, 0)),
        scratch_shapes=[pltpu.VMEM((tm, D), jnp.float32)],
    )

    out_pad = pl.pallas_call(
        _mlp_fused_kernel,
        out_shape=jax.ShapeDtypeStruct((B_pad, D), jnp.float32),
        grid_spec=grid_spec,
        compiler_params=pltpu.CompilerParams(
            dimension_semantics=("parallel", "arbitrary"),
            vmem_limit_bytes=vmem_limit,
        ),
        cost_estimate=cost,
    )(act_codes, x_pad, w_stack, b_stack)

    return out_pad[:B, :dims[-1]]


# ----------------------------- init + reference ----------------------------- #

def init_mlp_params(key, d_in, d_outs, exact=True, dtype=jnp.float32):
    """Matches MLP._initialize_layers.

    exact=True  -> weight = eye(d_out), bias = 0 (requires square layers).
    exact=False -> torch.nn.Linear default uniform(-1/sqrt(d_in), 1/sqrt(d_in)).
    Weights are returned pre-transposed as (d_in, d_out).
    """
    params = []
    cur_in = d_in
    for d_out in d_outs:
        key, kw, kb = jax.random.split(key, 3)
        if exact:
            assert d_out == cur_in, "exact=True uses identity weights -> square layers"
            w_t = jnp.eye(d_out, dtype=dtype)
            b = jnp.zeros((d_out,), dtype=dtype)
        else:
            bound = 1.0 / float(cur_in) ** 0.5
            w = jax.random.uniform(kw, (d_out, cur_in), dtype, -bound, bound)
            w_t = w.T
            b = jax.random.uniform(kb, (d_out,), dtype, -bound, bound)
        params.append((w_t, b))
        cur_in = d_out
    return params


def mlp_forward_ref(x, params, act_names):
    """Pure-JAX f32 reference."""
    acts = {"relu": lambda v: jnp.maximum(v, 0.0),
            "tanh": jnp.tanh,
            "sigmoid": jax.nn.sigmoid,
            "identity": lambda v: v}
    for i, (w_t, b) in enumerate(params):
        x = x @ w_t + b
        if act_names:
            x = acts[act_names[i]](x)
    return x


# --------------------------------- main ------------------------------------ #

if __name__ == "__main__":
    key = jax.random.PRNGKey(0)

    batch = 8
    d_in = 32
    d_outs = [64, 48, 32]                       # non-square layers (exact=False path)
    act_names = ["relu", "tanh", "sigmoid"]

    key, kx, kp = jax.random.split(key, 3)
    x = jax.random.normal(kx, (batch, d_in), dtype=jnp.float32)
    params = init_mlp_params(kp, d_in, d_outs, exact=False)

    # f32 MXU path — bitwise-close to the reference.
    out = jax.block_until_ready(mlp_forward(x, params, act_names))
    ref = mlp_forward_ref(x, params, act_names)
    assert out.shape == (batch, d_outs[-1])
    assert jnp.allclose(out, ref, atol=1e-5, rtol=1e-5), "f32 path mismatch"

    # bf16 operand path (f32 accumulation) — looser tolerance.
    out_bf16 = jax.block_until_ready(
        mlp_forward(x, params, act_names, compute_dtype=jnp.bfloat16))
    assert jnp.allclose(out_bf16, ref, atol=5e-2, rtol=5e-2), "bf16 path mismatch"

    # exact=True configuration (identity weights, zero bias -> square layers).
    d_sq = [32, 32, 32]
    params_exact = init_mlp_params(kp, d_in, d_sq, exact=True)
    out_e = jax.block_until_ready(mlp_forward(x, params_exact, act_names))
    ref_e = mlp_forward_ref(x, params_exact, act_names)
    assert jnp.allclose(out_e, ref_e, atol=1e-5, rtol=1e-5), "exact path mismatch"

    print("KERNEL_OK")
</pallas_src>

<mosaic_0001>
module attributes {stable_mosaic.version = 11 : i64} {
  func.func @_mlp_fused_kernel(%arg0: i32, %arg1: i32, %arg2: memref<3xi32, #tpu.memory_space<smem>>, %arg3: memref<8x128xf32, #tpu.memory_space<vmem>>, %arg4: memref<1x128x128xf32, #tpu.memory_space<vmem>>, %arg5: memref<1x1x128xf32, #tpu.memory_space<vmem>>, %arg6: memref<8x128xf32, #tpu.memory_space<vmem>>, %arg7: memref<8x128xf32, #tpu.memory_space<vmem>>) attributes {dimension_semantics = [#tpu.dimension_semantics<parallel>, #tpu.dimension_semantics<arbitrary>], iteration_bounds = array<i64: 1, 3>, scalar_prefetch = 1 : i64, scratch_operands = 1 : i64, tpu.core_type = #tpu.core_type<tc>, window_params = [{transform_indices = @transform_0, window_bounds = array<i64: 8, 128>}, {transform_indices = @transform_1, window_bounds = array<i64: 1, 128, 128>}, {transform_indices = @transform_2, window_bounds = array<i64: 1, 1, 128>}, {transform_indices = @transform_3, window_bounds = array<i64: 8, 128>}]} {
    %c0_i32 = arith.constant 0 : i32
    %0 = arith.cmpi eq, %arg1, %c0_i32 : i32
    %1 = arith.extui %0 : i1 to i32
    %c0_i32_0 = arith.constant 0 : i32
    %2 = arith.cmpi ne, %1, %c0_i32_0 : i32
    scf.if %2 {
      %c0_14 = arith.constant 0 : index
      %c0_15 = arith.constant 0 : index
      %31 = vector.load %arg3[%c0_14, %c0_15] : memref<8x128xf32, #tpu.memory_space<vmem>>, vector<8x128xf32>
      %c0_16 = arith.constant 0 : index
      %c0_17 = arith.constant 0 : index
      %32 = vector.load %arg7[%c0_16, %c0_17] : memref<8x128xf32, #tpu.memory_space<vmem>>, vector<8x128xf32>
      tpu.vector_store %arg7[%c0_16, %c0_17], %31 {strides = array<i32>} : memref<8x128xf32, #tpu.memory_space<vmem>>, vector<8x128xf32>,
    } else {
    }
    %c0 = arith.constant 0 : index
    %c0_1 = arith.constant 0 : index
    %3 = vector.load %arg7[%c0, %c0_1] : memref<8x128xf32, #tpu.memory_space<vmem>>, vector<8x128xf32>
    %c0_2 = arith.constant 0 : index
    %c0_3 = arith.constant 0 : index
    %c0_4 = arith.constant 0 : index
    %4 = vector.load %arg4[%c0_2, %c0_3, %c0_4] : memref<1x128x128xf32, #tpu.memory_space<vmem>>, vector<1x128x128xf32>
    %5 = vector.shape_cast %4 : vector<1x128x128xf32> to vector<128x128xf32>
    %cst = arith.constant dense<0.000000e+00> : vector<8x128xf32>
    %6 = tpu.matmul %3, %5, %cst {dimension_numbers = #tpu.dot_dimension_numbers<[1], [0], [0], [1], [0, 0, 1, 1], [], []>} : vector<8x128xf32>, vector<128x128xf32>, vector<8x128xf32> -> vector<8x128xf32>
    %c0_5 = arith.constant 0 : index
    %c0_6 = arith.constant 0 : index
    %c0_7 = arith.constant 0 : index
    %7 = vector.load %arg5[%c0_5, %c0_6, %c0_7] : memref<1x1x128xf32, #tpu.memory_space<vmem>>, vector<1x1x128xf32>
    %8 = vector.shape_cast %7 : vector<1x1x128xf32> to vector<1x128xf32>
    %9 = vector.broadcast %8 : vector<1x128xf32> to vector<8x128xf32>
    %10 = arith.addf %6, %9 : vector<8x128xf32>
    %11 = arith.index_cast %arg1 : i32 to index
    %12 = memref.load %arg2[%11] : memref<3xi32, #tpu.memory_space<smem>>
    %c1_i32 = arith.constant 1 : i32
    %13 = arith.cmpi eq, %12, %c1_i32 : i32
    %cst_8 = arith.constant 0.000000e+00 : f32
    %14 = vector.broadcast %cst_8 : f32 to vector<8x128xf32>
    %15 = arith.maximumf %10, %14 : vector<8x128xf32>
    %16 = arith.select %13, %15, %10 : vector<8x128xf32>
    %c2_i32 = arith.constant 2 : i32
    %17 = arith.cmpi eq, %12, %c2_i32 : i32
    %18 = math.tanh %16 : vector<8x128xf32>
    %19 = arith.select %17, %18, %16 : vector<8x128xf32>
    %c3_i32 = arith.constant 3 : i32
    %20 = arith.cmpi eq, %12, %c3_i32 : i32
    %21 = arith.negf %19 : vector<8x128xf32>
    %22 = math.exp %21 : vector<8x128xf32>
    %cst_9 = arith.constant 1.000000e+00 : f32
    %23 = vector.broadcast %cst_9 : f32 to vector<8x128xf32>
    %24 = arith.addf %23, %22 : vector<8x128xf32>
    %25 = arith.divf %23, %24 : vector<8x128xf32>
    %26 = arith.select %20, %25, %19 : vector<8x128xf32>
    %c0_10 = arith.constant 0 : index
    %c0_11 = arith.constant 0 : index
    %27 = vector.load %arg7[%c0_10, %c0_11] : memref<8x128xf32, #tpu.memory_space<vmem>>, vector<8x128xf32>
    tpu.vector_store %arg7[%c0_10, %c0_11], %26 {strides = array<i32>} : memref<8x128xf32, #tpu.memory_space<vmem>>, vector<8x128xf32>,
    %c2_i32_12 = arith.constant 2 : i32
    %28 = arith.cmpi eq, %arg1, %c2_i32_12 : i32
    %29 = arith.extui %28 : i1 to i32
    %c0_i32_13 = arith.constant 0 : i32
    %30 = arith.cmpi ne, %29, %c0_i32_13 : i32
    scf.if %30 {
      %c0_14 = arith.constant 0 : index
      %c0_15 = arith.constant 0 : index
      %31 = vector.load %arg6[%c0_14, %c0_15] : memref<8x128xf32, #tpu.memory_space<vmem>>, vector<8x128xf32>
      tpu.vector_store %arg6[%c0_14, %c0_15], %26 {strides = array<i32>} : memref<8x128xf32, #tpu.memory_space<vmem>>, vector<8x128xf32>,
    } else {
    }
    return
  }
  func.func @transform_0(%arg0: i32, %arg1: i32, %arg2: memref<3xi32, #tpu.memory_space<smem>>) -> (i32, i32) {
    %c0_i32 = arith.constant 0 : i32
    %c0_i32_0 = arith.constant 0 : i32
    return %arg0, %c0_i32 : i32, i32
  }
  func.func @transform_1(%arg0: i32, %arg1: i32, %arg2: memref<3xi32, #tpu.memory_space<smem>>) -> (i32, i32, i32) {
    %c0_i32 = arith.constant 0 : i32
    %c0_i32_0 = arith.constant 0 : i32
    %c0_i32_1 = arith.constant 0 : i32
    return %arg1, %c0_i32, %c0_i32_0 : i32, i32, i32
  }
  func.func @transform_2(%arg0: i32, %arg1: i32, %arg2: memref<3xi32, #tpu.memory_space<smem>>) -> (i32, i32, i32) {
    %c0_i32 = arith.constant 0 : i32
    %c0_i32_0 = arith.constant 0 : i32
    %c0_i32_1 = arith.constant 0 : i32
    return %arg1, %c0_i32, %c0_i32_0 : i32, i32, i32
  }
  func.func @transform_3(%arg0: i32, %arg1: i32, %arg2: memref<3xi32, #tpu.memory_space<smem>>) -> (i32, i32) {
    %c0_i32 = arith.constant 0 : i32
    %c0_i32_0 = arith.constant 0 : i32
    return %arg0, %c0_i32 : i32, i32
  }
}

</mosaic_0001>

<llo_original>
// kernel: tpu_custom_call.1
$region0: #{tpu_custom_call.1}
  #allocation0 [shape = 'u32[]', space=smem, size = 0x4, offset = 0x4, fixed_abs, tag = 'smem constant byte address 0x4 - core index']
  #allocation1 [shape = 'u32[144,128]{1,0:T(1,128)}', space=vmem, size = 0x12000, scoped, tag = 'internal scratch']
  #allocation2 [shape = 'f32[8,128]{1,0:T(8,128)}', space=vmem, size = 0x1000, scoped, tag = 'scratch operand']
  #allocation3 [shape = 's32[1]{0}', space=sflag, size = 0x4, scoped, tag = 'scoped memory for tpu_custom_call.1']
  #allocation4 [shape = 'u8[512]{0}', space=smem, size = 0x200, scoped, tag = 'prefetched SMEM operand 0']
  %s0 = inlined_call_operand.hbm [shape: s32[3], index: 0, kind: input, shape index: {}]
  %s1 = inlined_call_operand.hbm [shape: f32[8,128], index: 1, kind: input, shape index: {}]
  %s2 = inlined_call_operand.hbm [shape: f32[3,128,128], index: 2, kind: input, shape index: {}]
  %s3 = inlined_call_operand.vmem [shape: f32[3,1,128], index: 3, kind: input, shape index: {}]
  %s4 = inlined_call_operand.hbm [shape: f32[8,128], index: 4, kind: output, shape index: {}]
  %s5 = sld [smem:[#allocation0]]
  $region61: #{tpu_custom_call.1} parent=0
    _
  %s7 = ssub.s32 1, %s5
  %s8 = scalar_select 0, %s7, %s5
  %10 = dma.hbm_to_smem %s0, 16, [#allocation4], [#allocation3]
  %11 = dma.done [#allocation3], 16
  %12 = sfence
  $region1: #{tpu_custom_call.1} parent=0
    #allocation5 [shape = 'u8[4096]{0}', space=vmem, size = 0x1000, scoped, tag = 'input window, operand 1, single buffered']
    #allocation6 [shape = 's32[2]{0}', space=sflag, size = 0x8, scoped, tag = 'scoped memory for tpu_custom_call.1']
    #allocation7 [shape = 's32[2]{0}', space=sflag, size = 0x8, scoped, tag = 'scoped memory for tpu_custom_call.1']
    #allocation8 [shape = 'u8[131072]{0}', space=vmem, size = 0x20000, scoped, tag = 'input window, operand 2']
    #allocation9 [shape = 's32[2]{0}', space=sflag, size = 0x8, scoped, tag = 'scoped memory for tpu_custom_call.1']
    #allocation10 [shape = 'u8[4096]{0}', space=vmem, size = 0x1000, scoped, tag = 'output window, operand 0, single buffered']
    %13 = vsyncpa [#allocation6], 0
    %14 = vsyncpa [#allocation9], 0
    %s15 = scalar_lea.sflag [#allocation9], 1
    %16 = vsyncpa %s15, 0
    %17 = vsyncpa [#allocation7], 0
    loop: start=0, step=1, limit=5
    $region2: #{tpu_custom_call.1} parent=1 // loop_pre_header
      _
    $region3: #{tpu_custom_call.1} parent=1 // loop_header
      %s19 = sphi 0, %s23
      %p20 = scmp.ge.s32.totalorder %s19, 5
      %s26 = sphi 0, %s38
      %s27 = sphi 0, %s34
      %s28 = sphi 0, %s26
      %s29 = sphi 0, %s27
      %s30 = sphi 0, %s28
      %s31 = sphi 0, %s29
      %s41 = sphi 0, %s43
      %s44 = sphi 0, %s41
      %s45 = sphi 0, %s44
      %s61 = sphi 0, %s45
      %s67 = sphi 0, %s69
      %s70 = sphi 0, %s67
      %s71 = sphi 0, %s70
      %s87 = sphi 0, %s71
      %s93 = sphi 0, %s95
      %s96 = sphi 0, %s93
      %s97 = sphi 0, %s96
      %s113 = sphi 0, %s97
      %s119 = sphi 0, %s121
      %s122 = sphi 0, %s119
      %s123 = sphi 0, %s122
      %s139 = sphi 0, %s123
    $region4: #{tpu_custom_call.1} parent=1 // loop_header_branch
      %22 = sbr.rel (%p20) target = $region8
    $region5: #{tpu_custom_call.1} parent=1 // loop_body
      %s24 = ssub.s32 %s19, 1
      %s25 = ssub.s32 %s19, 2
      %s32 = sadd.s32 1, %s27
      %p33 = scmp.ge.s32.totalorder %s32, 3
      %s34 = scalar_select %p33, 0, %s32
      %s35 = sadd.s32 1, %s26
      %s36 = scalar_select %p33, %s35, %s26
      %p37 = scmp.ge.s32.totalorder %s36, 1
      %s38 = scalar_select %p37, 0, %s36
      %s39 = ssub.s32 %s26, %s38
      %p40 = scmp.eq.s32.totalorder %s39, 0
      %s42 = sadd.s32 %s41, 1
      %s43 = scalar_select %p40, %s41, %s42
      %p46 = pneg %p40
      %p47 = scmp.eq.s32.totalorder %s19, 2
      %p48 = por %p46, %p47
      %p49 = scmp.ne.s32.totalorder %s41, %s44
      %p50 = scmp.eq.s32.totalorder %s19, 0
      %p51 = por %p49, %p50
      %p52 = scmp.ne.s32.totalorder %s41, %s44
      %p53 = scmp.eq.s32.totalorder %s24, 2
      %p54 = por %p52, %p53
      %p55 = scmp.ne.s32.totalorder %s44, %s45
      %p56 = scmp.eq.s32.totalorder %s24, 0
      %p57 = por %p55, %p56
      %p58 = scmp.ne.s32.totalorder %s44, %s45
      %p59 = scmp.eq.s32.totalorder %s25, 2
      %p60 = por %p58, %p59
      %p62 = scmp.ne.s32.totalorder %s45, %s61
      %p63 = scmp.eq.s32.totalorder %s25, 0
      %p64 = por %p62, %p63
      %s65 = ssub.s32 %s27, %s34
      %p66 = scmp.eq.s32.totalorder %s65, 0
      %s68 = sadd.s32 %s67, 1
      %s69 = scalar_select %p66, %s67, %s68
      %p72 = pneg %p66
      %p73 = scmp.eq.s32.totalorder %s19, 2
      %p74 = por %p72, %p73
      %p75 = scmp.ne.s32.totalorder %s67, %s70
      %p76 = scmp.eq.s32.totalorder %s19, 0
      %p77 = por %p75, %p76
      %p78 = scmp.ne.s32.totalorder %s67, %s70
      %p79 = scmp.eq.s32.totalorder %s24, 2
      %p80 = por %p78, %p79
      %p81 = scmp.ne.s32.totalorder %s70, %s71
      %p82 = scmp.eq.s32.totalorder %s24, 0
      %p83 = por %p81, %p82
      %p84 = scmp.ne.s32.totalorder %s70, %s71
      %p85 = scmp.eq.s32.totalorder %s25, 2
      %p86 = por %p84, %p85
      %p88 = scmp.ne.s32.totalorder %s71, %s87
      %p89 = scmp.eq.s32.totalorder %s25, 0
      %p90 = por %p88, %p89
      %s91 = ssub.s32 %s27, %s34
      %p92 = scmp.eq.s32.totalorder %s91, 0
      %s94 = sadd.s32 %s93, 1
      %s95 = scalar_select %p92, %s93, %s94
      %p98 = pneg %p92
      %p99 = scmp.eq.s32.totalorder %s19, 2
      %p100 = por %p98, %p99
      %p101 = scmp.ne.s32.totalorder %s93, %s96
      %p102 = scmp.eq.s32.totalorder %s19, 0
      %p103 = por %p101, %p102
      %p104 = scmp.ne.s32.totalorder %s93, %s96
      %p105 = scmp.eq.s32.totalorder %s24, 2
      %p106 = por %p104, %p105
      %p107 = scmp.ne.s32.totalorder %s96, %s97
      %p108 = scmp.eq.s32.totalorder %s24, 0
      %p109 = por %p107, %p108
      %p110 = scmp.ne.s32.totalorder %s96, %s97
      %p111 = scmp.eq.s32.totalorder %s25, 2
      %p112 = por %p110, %p111
      %p114 = scmp.ne.s32.totalorder %s97, %s113
      %p115 = scmp.eq.s32.totalorder %s25, 0
      %p116 = por %p114, %p115
      %s117 = ssub.s32 %s26, %s38
      %p118 = scmp.eq.s32.totalorder %s117, 0
      %s120 = sadd.s32 %s119, 1
      %s121 = scalar_select %p118, %s119, %s120
      %p124 = pneg %p118
      %p125 = scmp.eq.s32.totalorder %s19, 2
      %p126 = por %p124, %p125
      %p127 = scmp.ne.s32.totalorder %s119, %s122
      %p128 = scmp.eq.s32.totalorder %s19, 0
      %p129 = por %p127, %p128
      %p130 = scmp.ne.s32.totalorder %s119, %s122
      %p131 = scmp.eq.s32.totalorder %s24, 2
      %p132 = por %p130, %p131
      %p133 = scmp.ne.s32.totalorder %s122, %s123
      %p134 = scmp.eq.s32.totalorder %s24, 0
      %p135 = por %p133, %p134
      %p136 = scmp.ne.s32.totalorder %s122, %s123
      %p137 = scmp.eq.s32.totalorder %s25, 2
      %p138 = por %p136, %p137
      %p140 = scmp.ne.s32.totalorder %s123, %s139
      %p141 = scmp.eq.s32.totalorder %s25, 0
      %p142 = por %p140, %p141
      %p143 = scmp.le.s32.totalorder 1, %s19
      %p144 = scmp.lt.s32.totalorder %s19, 4
      %p145 = pnand %p143, %p144
      %p146 = pneg %p145
      // Predicated region
      $region9: #{tpu_custom_call.1} parent=5 // pred_check
        _
      $region10: #{tpu_custom_call.1} parent=5 // pred_check_branch
        %148 = sbr.rel (%p145) target = $region12
      $region11: #{tpu_custom_call.1} parent=5 // pred_region
        %s149 = ssub.s32 %s19, 1
        // Predicated region
        $region13: #{tpu_custom_call.1} parent=11 // pred_check
          %p150 = pneg %p57
        $region14: #{tpu_custom_call.1} parent=11 // pred_check_branch
          %152 = sbr.rel (%p150) target = $region16
        $region15: #{tpu_custom_call.1} parent=11 // pred_region
          %s154 = ssub.s32 128, 128
          %155 = vsyncadd [#allocation6], %s154
          %s156 = smul.addr %s28, 128
          %s157 = scalar_lea.hbm %s1, %s156
          %s159 = sshll.u32 [#allocation5], 4
          %s160 = int_to_ptr.vmem [resolvable:$true] %s159
          %162 = dma.hbm_to_vmem [thread:$0]  %s157, 128, %s160, [#allocation6]
        $region16: #{tpu_custom_call.1} parent=11 // pred_fallthru
          _
      $region12: #{tpu_custom_call.1} parent=5 // pred_fallthru
        _
      %p163 = scmp.lt.s32.totalorder %s19, 3
      // Predicated region
      $region17: #{tpu_custom_call.1} parent=5 // pred_check
        %p164 = pneg %p163
      $region18: #{tpu_custom_call.1} parent=5 // pred_check_branch
        %166 = sbr.rel (%p164) target = $region20
      $region19: #{tpu_custom_call.1} parent=5 // pred_region
        // Predicated region
        $region21: #{tpu_custom_call.1} parent=19 // pred_check
          %p167 = pneg %p77
        $region22: #{tpu_custom_call.1} parent=19 // pred_check_branch
          %169 = sbr.rel (%p167) target = $region24
        $region23: #{tpu_custom_call.1} parent=19 // pred_region
          %s170 = sand.u32 %s67, 1
          %s171 = scalar_lea.sflag [#allocation9], %s170
          %s172 = sand.u32 %s67, 1
          %s173 = smul.addr %s172, 128
          %s174 = scalar_lea.vmem [#allocation8], %s173
          %s176 = ssub.s32 2048, 2048
          %177 = vsyncadd %s171, %s176
          %s178 = smul.addr %s27, 16
          %s179 = smul.addr %s178, 128
          %s180 = scalar_lea.hbm %s2, %s179
          %s181 = sshll.u32 %s174, 4
          %s182 = int_to_ptr.vmem [resolvable:$true] %s181
          %187 = dma.hbm_to_vmem [thread:$0]  %s180, 2048, %s182, %s171, 128, 128, 8
        $region24: #{tpu_custom_call.1} parent=19 // pred_fallthru
          _
        // Predicated region
        $region25: #{tpu_custom_call.1} parent=19 // pred_check
          %p188 = pneg %p103
        $region26: #{tpu_custom_call.1} parent=19 // pred_check_branch
          %190 = sbr.rel (%p188) target = $region28
        $region27: #{tpu_custom_call.1} parent=19 // pred_region
          %p191 = scmp.lt.s32.totalorder %s27, 2
          %s192 = scalar_select %p191, %s27, 2
          %s193 = scalar_lea.vmem %s3, %s192
        $region28: #{tpu_custom_call.1} parent=19 // pred_fallthru
          _
      $region20: #{tpu_custom_call.1} parent=5 // pred_fallthru
        _
      %p194 = scmp.le.s32.totalorder 1, %s19
      %p195 = scmp.lt.s32.totalorder %s19, 4
      %p196 = pnand %p194, %p195
      %p197 = pneg %p196
      // Predicated region
      $region29: #{tpu_custom_call.1} parent=5 // pred_check
        _
      $region30: #{tpu_custom_call.1} parent=5 // pred_check_branch
        %199 = sbr.rel (%p196) target = $region32
      $region31: #{tpu_custom_call.1} parent=5 // pred_region
        %s200 = ssub.s32 %s19, 1
        // Predicated region
        $region33: #{tpu_custom_call.1} parent=31 // pred_check
          %p201 = pneg %p57
        $region34: #{tpu_custom_call.1} parent=31 // pred_check_branch
          %203 = sbr.rel (%p201) target = $region36
        $region35: #{tpu_custom_call.1} parent=31 // pred_region
          %204 = dma.done [#allocation6], 128
        $region36: #{tpu_custom_call.1} parent=31 // pred_fallthru
          _
        %s205 = sand.u32 %s70, 1
        %s206 = scalar_lea.sflag [#allocation9], %s205
        %s207 = sand.u32 %s70, 1
        %s208 = smul.addr %s207, 128
        %s209 = scalar_lea.vmem [#allocation8], %s208
        // Predicated region
        $region37: #{tpu_custom_call.1} parent=31 // pred_check
          %p210 = pneg %p83
        $region38: #{tpu_custom_call.1} parent=31 // pred_check_branch
          %212 = sbr.rel (%p210) target = $region40
        $region39: #{tpu_custom_call.1} parent=31 // pred_region
          %213 = dma.done %s206, 2048
        $region40: #{tpu_custom_call.1} parent=31 // pred_fallthru
          _
        %p214 = pneg %p57
        %p215 = pneg %p54
        %s216 = sand.u32 %s70, 1
        %s217 = scalar_lea.sflag [#allocation9], %s216
        %s218 = sand.u32 %s70, 1
        %s219 = smul.addr %s218, 128
        %s220 = scalar_lea.vmem [#allocation8], %s219
        %p221 = pneg %p83
        %p222 = pneg %p80
        %p223 = scmp.lt.s32.totalorder %s29, 2
        %s224 = scalar_select %p223, %s29, 2
        %s225 = scalar_lea.vmem %s3, %s224
        %p226 = pneg %p109
        %p227 = pneg %p106
        %p228 = pneg %p135
        %p229 = pneg %p132
        %p230 = scmp.lt.s32.totalorder %s29, 2
        %s231 = scalar_select %p230, %s29, 2
        %s232 = scalar_lea.vmem %s3, %s231
        %p233 = scmp.eq.s32.totalorder %s29, 0
        // Predicated region
        $region41: #{tpu_custom_call.1} parent=31 // pred_check
          %p234 = pneg %p233
        $region42: #{tpu_custom_call.1} parent=31 // pred_check_branch
          %236 = sbr.rel (%p234) target = $region44
        $region43: #{tpu_custom_call.1} parent=31 // pred_region
          %v237 = vld [vmem:[#allocation5] sm:$0xff]
          %238 = vst [vmem:[#allocation2] sm:$0xff] %v237
        $region44: #{tpu_custom_call.1} parent=31 // pred_fallthru
          _
        %v239 = vld [vmem:[#allocation2] sm:$0xff]
        %v240 = vld [vmem:[%s209] sm:$0xff]
        %v241 = vld [vmem:[%s209 + $0x8] sm:$0xff]
        %v242 = vld [vmem:[%s209 + $0x10] sm:$0xff]
        %v243 = vld [vmem:[%s209 + $0x18] sm:$0xff]
        %v244 = vld [vmem:[%s209 + $0x20] sm:$0xff]
        %v245 = vld [vmem:[%s209 + $0x28] sm:$0xff]
        %v246 = vld [vmem:[%s209 + $0x30] sm:$0xff]
        %v247 = vld [vmem:[%s209 + $0x38] sm:$0xff]
        %v248 = vld [vmem:[%s209 + $0x40] sm:$0xff]
        %v249 = vld [vmem:[%s209 + $0x48] sm:$0xff]
        %v250 = vld [vmem:[%s209 + $0x50] sm:$0xff]
        %v251 = vld [vmem:[%s209 + $0x58] sm:$0xff]
        %v252 = vld [vmem:[%s209 + $0x60] sm:$0xff]
        %v253 = vld [vmem:[%s209 + $0x68] sm:$0xff]
        %v254 = vld [vmem:[%s209 + $0x70] sm:$0xff]
        %v255 = vld [vmem:[%s209 + $0x78] sm:$0xff]
        %v256 = vld [vmem:[%s232] sm:$0x1]
        %v258 = vlaneseq
        %v259 = vshrl.u32 %v258, 7
        %v260 = vsub.s32 0, %v259
        %v261 = vrot.slane %v256, %v260
        %263 = vmatprep.subr.mxu0 0.0
        %264 = vmatpush1.msra.mxu0 %v255
        %265 = vmatprep.subr.mxu0 0.0
        %266 = vmatpush1.msra.mxu0 %v254
        %267 = vmatprep.subr.mxu0 0.0
        %268 = vmatpush1.msra.mxu0 %v253
        %269 = vmatprep.subr.mxu0 0.0
        %270 = vmatpush1.msra.mxu0 %v252
        %271 = vmatprep.subr.mxu0 0.0
        %272 = vmatpush1.msra.mxu0 %v251
        %273 = vmatprep.subr.mxu0 0.0
        %274 = vmatpush1.msra.mxu0 %v250
        %275 = vmatprep.subr.mxu0 0.0
        %276 = vmatpush1.msra.mxu0 %v249
        %277 = vmatprep.subr.mxu0 0.0
        %278 = vmatpush1.msra.mxu0 %v248
        %279 = vmatprep.subr.mxu0 0.0
        %280 = vmatpush1.msra.mxu0 %v247
        %281 = vmatprep.subr.mxu0 0.0
        %282 = vmatpush1.msra.mxu0 %v246
        %283 = vmatprep.subr.mxu0 0.0
        %284 = vmatpush1.msra.mxu0 %v245
        %285 = vmatprep.subr.mxu0 0.0
        %286 = vmatpush1.msra.mxu0 %v244
        %287 = vmatprep.subr.mxu0 0.0
        %288 = vmatpush1.msra.mxu0 %v243
        %289 = vmatprep.subr.mxu0 0.0
        %290 = vmatpush1.msra.mxu0 %v242
        %291 = vmatprep.subr.mxu0 0.0
        %292 = vmatpush1.msra.mxu0 %v241
        %293 = vmatprep.subr.mxu0 0.0
        %294 = vmatpush1.msra.mxu0 %v240
        %295 = vmatprep.subr.mxu0 0.0
        %296 = vmatpush2.msra.mxu0 0.0
        %297 = vmatprep.subr.mxu0 0.0
        %298 = vmatpush2.msra.mxu0 0.0
        %299 = vmatprep.subr.mxu0 0.0
        %300 = vmatpush2.msra.mxu0 0.0
        %301 = vmatprep.subr.mxu0 0.0
        %302 = vmatpush2.msra.mxu0 0.0
        %303 = vmatprep.subr.mxu0 0.0
        %304 = vmatpush2.msra.mxu0 0.0
        %305 = vmatprep.subr.mxu0 0.0
        %306 = vmatpush2.msra.mxu0 0.0
        %307 = vmatprep.subr.mxu0 0.0
        %308 = vmatpush2.msra.mxu0 0.0
        %309 = vmatprep.subr.mxu0 0.0
        %310 = vmatpush2.msra.mxu0 0.0
        %311 = vmatprep.subr.mxu0 0.0
        %312 = vmatpush2.msra.mxu0 0.0
        %313 = vmatprep.subr.mxu0 0.0
        %314 = vmatpush2.msra.mxu0 0.0
        %315 = vmatprep.subr.mxu0 0.0
        %316 = vmatpush2.msra.mxu0 0.0
        %317 = vmatprep.subr.mxu0 0.0
        %318 = vmatpush2.msra.mxu0 0.0
        %319 = vmatprep.subr.mxu0 0.0
        %320 = vmatpush2.msra.mxu0 0.0
        %321 = vmatprep.subr.mxu0 0.0
        %322 = vmatpush2.msra.mxu0 0.0
        %323 = vmatprep.subr.mxu0 0.0
        %324 = vmatpush2.msra.mxu0 0.0
        %325 = vmatprep.subr.mxu0 0.0
        %326 = vmatpush2.msra.mxu0 0.0
        %327 = vmatprep.mubr.f32.mxu0 0.0
        %328 = vmatmul.mubr.f32.gmra.mxu0 %v239
        %v329 = vpop.f32.mrf.mxu0
        %v330 = vadd.f32 %v261, %v329
        %v331 = vpop.f32.mrf.mxu0
        %332 = vdwg.mxu0
        %s333 = sld [smem:[#allocation4 + %s29]]
        %p334 = scmp.eq.s32.totalorder %s333, 1
        %v335 = vmax.f32 %v330, 0.0
        %s336 = scalar_select %p334, 1, 0
        %v337 = vstv %s336
        %vm338 = vcmp.eq.s32.totalorder %v337, 1
        %v339 = vsel %vm338, %v335, %v330
        %p340 = scmp.eq.s32.totalorder %s333, 2
        %v341 = vtanh.pop %v339
        %s342 = scalar_select %p340, 1, 0
        %v343 = vstv %s342
        %vm344 = vcmp.eq.s32.totalorder %v343, 1
        %v345 = vsel %vm344, %v341, %v339
        %p346 = scmp.eq.s32.totalorder %s333, 3
        %v347 = vxor.u32 %v345, 2147483648
        %v348 = vmul.f32 %v347, 1.442695
        %v349 = vpow.pop %v348
        %v350 = vadd.f32 %v349, 1.0
        %v351 = vrcp.pop %v350
        %v352 = vmul.f32 1.0, %v351
        %s353 = scalar_select %p346, 1, 0
        %v354 = vstv %s353
        %vm355 = vcmp.eq.s32.totalorder %v354, 1
        %v356 = vsel %vm355, %v352, %v345
        %357 = vst [vmem:[#allocation2] sm:$0xff] %v356
        %p358 = scmp.eq.s32.totalorder %s29, 2
        // Predicated region
        $region45: #{tpu_custom_call.1} parent=31 // pred_check
          %p359 = pneg %p358
        $region46: #{tpu_custom_call.1} parent=31 // pred_check_branch
          %361 = sbr.rel (%p359) target = $region48
        $region47: #{tpu_custom_call.1} parent=31 // pred_region
          %362 = vst [vmem:[#allocation10] sm:$0xff] %v356
        $region48: #{tpu_custom_call.1} parent=31 // pred_fallthru
          _
        // Predicated region
        $region49: #{tpu_custom_call.1} parent=31 // pred_check
          %p363 = pneg %p132
        $region50: #{tpu_custom_call.1} parent=31 // pred_check_branch
          %365 = sbr.rel (%p363) target = $region52
        $region51: #{tpu_custom_call.1} parent=31 // pred_region
          %s367 = ssub.s32 128, 128
          %368 = vsyncadd [#allocation7], %s367
          %s369 = smul.addr %s28, 128
          %s370 = scalar_lea.hbm %s4, %s369
          %s372 = sshll.u32 [#allocation10], 4
          %s373 = int_to_ptr.vmem [resolvable:$true] %s372
          %375 = dma.vmem_to_hbm [thread:$0]  %s373, 128, %s370, [#allocation7]
        $region52: #{tpu_custom_call.1} parent=31 // pred_fallthru
          _
        // Predicated region
        $region53: #{tpu_custom_call.1} parent=31 // pred_check
          %p376 = pneg %p132
        $region54: #{tpu_custom_call.1} parent=31 // pred_check_branch
          %378 = sbr.rel (%p376) target = $region56
        $region55: #{tpu_custom_call.1} parent=31 // pred_region
          %379 = dma.done [#allocation7], 128
        $region56: #{tpu_custom_call.1} parent=31 // pred_fallthru
          _
      $region32: #{tpu_custom_call.1} parent=5 // pred_fallthru
        _
      %p380 = scmp.le.s32.totalorder 2, %s19
      // Predicated region
      $region57: #{tpu_custom_call.1} parent=5 // pred_check
        %p381 = pneg %p380
      $region58: #{tpu_custom_call.1} parent=5 // pred_check_branch
        %383 = sbr.rel (%p381) target = $region60
      $region59: #{tpu_custom_call.1} parent=5 // pred_region
        %s384 = ssub.s32 %s19, 2
      $region60: #{tpu_custom_call.1} parent=5 // pred_fallthru
        _
    $region6: #{tpu_custom_call.1} parent=1 // loop_footer
      %s23 = sadd.s32 1, %s19
    $region7: #{tpu_custom_call.1} parent=1 // loop_footer_branch
      %18 = sbr.rel target = $region3
    $region8: #{tpu_custom_call.1} parent=1 // loop_exit
      _
    %385 = vsyncpa [#allocation6], 1
    %s386 = scalar_lea.sflag [#allocation6], 1
    %387 = vsyncpa %s386, 1
    %388 = vsyncpa [#allocation9], 1
    %s389 = scalar_lea.sflag [#allocation9], 1
    %390 = vsyncpa %s389, 1
    %391 = vsyncpa [#allocation7], 1
    %s392 = scalar_lea.sflag [#allocation7], 1
    %393 = vsyncpa %s392, 1

</llo_original>
